<compile_context>
chip_gen: v7x
topology: tpu7x:2x2x1
jax: 0.10.0
libtpu: 0.0.40
codegen_flags: <defaults>
</compile_context>

<pallas_src>
import functools

import jax
import jax.numpy as jnp
import numpy as np
from jax.experimental import pallas as pl
from jax.experimental.pallas import tpu as pltpu


# ---------------------------------------------------------------------------
# Pallas kernel
# ---------------------------------------------------------------------------
def _channel_attn_kernel(x_ref, w1_ref, b1_ref, w2_ref, b2_ref, out_ref,
                         sum_acc, max_acc, *, hw_total, tile_hw,
                         negative_slope, needs_mask):
    t = pl.program_id(1)
    n_t = pl.num_programs(1)

    @pl.when(t == 0)
    def _init():
        sum_acc[...] = jnp.zeros_like(sum_acc)
        max_acc[...] = jnp.full(max_acc.shape, -jnp.inf, dtype=max_acc.dtype)

    x = x_ref[0].astype(jnp.float32)                       # (C1, tile_hw)

    if needs_mask:  # static: only emitted when HW % tile_hw != 0
        col = jax.lax.broadcasted_iota(jnp.int32, x.shape, 1) + t * tile_hw
        valid = col < hw_total
        x_sum = jnp.where(valid, x, 0.0)
        x_max = jnp.where(valid, x, -jnp.inf)
    else:
        x_sum = x
        x_max = x

    # reduce over the HW (lane) axis -> (C1, 1) partials, accumulate in f32
    sum_acc[...] = sum_acc[...] + jnp.sum(x_sum, axis=-1, keepdims=True)
    max_acc[...] = jnp.maximum(max_acc[...], jnp.max(x_max, axis=-1, keepdims=True))

    @pl.when(t == n_t - 1)
    def _finalize():
        avg = sum_acc[...] * (1.0 / hw_total)              # (C1, 1)
        mx = max_acc[...]                                  # (C1, 1)

        w1 = w1_ref[...]                                   # (mid, C1)  = Linear(c1,mid).weight
        b1 = b1_ref[...]                                   # (mid, 1)
        w2 = w2_ref[...]                                   # (C1, mid)  = Linear(mid,c1).weight
        b2 = b2_ref[...]                                   # (C1, 1)

        def mlp(v):                                        # v: (C1, 1) column
            h1 = jnp.dot(w1, v, preferred_element_type=jnp.float32) + b1   # (mid, 1)
            h1 = jnp.where(h1 > 0, h1, negative_slope * h1)                # LeakyReLU(0.1)
            return jnp.dot(w2, h1, preferred_element_type=jnp.float32) + b2  # (C1, 1)

        logits = mlp(avg) + mlp(mx)                        # shared MLP applied to both pools
        out_ref[0] = jax.nn.sigmoid(logits).astype(out_ref.dtype)


# ---------------------------------------------------------------------------
# Wrapper
# ---------------------------------------------------------------------------
def channel_attention_module(x_nchw, params, *, negative_slope=0.1, tile_hw=None):
    bs, c1, h, w = x_nchw.shape
    mid = params['w1'].shape[0]
    hw = h * w

    # view-style reshape only; keep NCHW channel-major layout (no HBM transpose)
    x_flat = x_nchw.reshape(bs, c1, hw)

    if tile_hw is None:
        # single full-HW tile when it comfortably fits VMEM, otherwise
        # lane-aligned tiles (keeps the double-buffered block small enough
        # for the 32 MiB scoped-VMEM default on all generations).
        tile_hw = hw if hw <= 4096 else 2048
    if tile_hw != hw:
        assert tile_hw % 128 == 0, "HW tile must be a multiple of 128 lanes"
    n_t = pl.cdiv(hw, tile_hw)

    kernel = functools.partial(
        _channel_attn_kernel,
        hw_total=hw, tile_hw=tile_hw,
        negative_slope=negative_slope,
        needs_mask=(hw % tile_hw != 0))

    out = pl.pallas_call(
        kernel,
        out_shape=jax.ShapeDtypeStruct((bs, c1, 1), x_nchw.dtype),
        grid_spec=pltpu.PrefetchScalarGridSpec(
            num_scalar_prefetch=0,
            grid=(bs, n_t),
            in_specs=[
                pl.BlockSpec((1, c1, tile_hw), lambda b, t: (b, 0, t)),  # x
                pl.BlockSpec((mid, c1), lambda b, t: (0, 0)),            # W1
                pl.BlockSpec((mid, 1), lambda b, t: (0, 0)),             # b1
                pl.BlockSpec((c1, mid), lambda b, t: (0, 0)),            # W2
                pl.BlockSpec((c1, 1), lambda b, t: (0, 0)),              # b2
            ],
            out_specs=pl.BlockSpec((1, c1, 1), lambda b, t: (b, 0, 0)),
            scratch_shapes=[
                pltpu.VMEM((c1, 1), jnp.float32),   # running sum
                pltpu.VMEM((c1, 1), jnp.float32),   # running max
            ],
        ),
        compiler_params=pltpu.CompilerParams(
            dimension_semantics=("parallel", "arbitrary")),
    )(x_flat, params['w1'], params['b1'], params['w2'], params['b2'])

    return out.reshape(bs, c1, 1, 1)


# ---------------------------------------------------------------------------
# Pure-JAX reference (mirrors the PyTorch forward) for validation.
# ---------------------------------------------------------------------------
def reference(x, params, negative_slope=0.1):
    bs, c1, h, w = x.shape
    avg = x.mean(axis=(2, 3))                              # (bs, c1)
    mx = x.max(axis=(2, 3))                                # (bs, c1)

    def mlp(v):
        h1 = v @ params['w1'].T + params['b1'][:, 0]
        h1 = jnp.where(h1 > 0, h1, negative_slope * h1)
        return h1 @ params['w2'].T + params['b2'][:, 0]

    out = jax.nn.sigmoid(mlp(avg) + mlp(mx))
    return out.reshape(bs, c1, 1, 1)


if __name__ == "__main__":
    # Module config: c1=64, reduction=16 -> mid=4 (default reduction).
    bs, c1, reduction = 2, 64, 16
    mid = c1 // reduction
    h = w = 16

    key = jax.random.PRNGKey(0)
    kx, k1, k2, k3, k4, kx2 = jax.random.split(key, 6)

    x = jax.random.normal(kx, (bs, c1, h, w), jnp.float32)
    params = {
        'w1': 0.2 * jax.random.normal(k1, (mid, c1), jnp.float32),   # Linear(c1,mid).weight
        'b1': 0.2 * jax.random.normal(k2, (mid, 1), jnp.float32),    # Linear(c1,mid).bias (column)
        'w2': 0.2 * jax.random.normal(k3, (c1, mid), jnp.float32),   # Linear(mid,c1).weight
        'b2': 0.2 * jax.random.normal(k4, (c1, 1), jnp.float32),     # Linear(mid,c1).bias (column)
    }

    # single-tile path
    out = jax.block_until_ready(channel_attention_module(x, params))
    assert out.shape == (bs, c1, 1, 1)
    np.testing.assert_allclose(np.asarray(out), np.asarray(reference(x, params)),
                               rtol=1e-5, atol=1e-5)

    # multi-tile + masked-tail path (HW = 320, 128-lane tiles -> 3 tiles, last masked)
    x2 = jax.random.normal(kx2, (bs, c1, 16, 20), jnp.float32)
    out2 = jax.block_until_ready(channel_attention_module(x2, params, tile_hw=128))
    np.testing.assert_allclose(np.asarray(out2), np.asarray(reference(x2, params)),
                               rtol=1e-5, atol=1e-5)

    print("KERNEL_OK")
</pallas_src>

<mosaic_0001>
module attributes {stable_mosaic.version = 11 : i64} {
  func.func @_channel_attn_kernel(%arg0: i32, %arg1: i32, %arg2: memref<1x64x256xf32, #tpu.memory_space<vmem>>, %arg3: memref<4x64xf32, #tpu.memory_space<vmem>>, %arg4: memref<4x1xf32, #tpu.memory_space<vmem>>, %arg5: memref<64x4xf32, #tpu.memory_space<vmem>>, %arg6: memref<64x1xf32, #tpu.memory_space<vmem>>, %arg7: memref<1x64x1xf32, #tpu.memory_space<vmem>>, %arg8: memref<64x1xf32, #tpu.memory_space<vmem>>, %arg9: memref<64x1xf32, #tpu.memory_space<vmem>>) attributes {dimension_semantics = [#tpu.dimension_semantics<parallel>, #tpu.dimension_semantics<arbitrary>], iteration_bounds = array<i64: 2, 1>, scalar_prefetch = 0 : i64, scratch_operands = 2 : i64, tpu.core_type = #tpu.core_type<tc>, window_params = [{transform_indices = @transform_0, window_bounds = array<i64: 1, 64, 256>}, {pipeline_mode = #tpu.pipeline_mode<synchronous>, transform_indices = @transform_1, window_bounds = array<i64: 4, 64>}, {pipeline_mode = #tpu.pipeline_mode<synchronous>, transform_indices = @transform_2, window_bounds = array<i64: 4, 1>}, {pipeline_mode = #tpu.pipeline_mode<synchronous>, transform_indices = @transform_3, window_bounds = array<i64: 64, 4>}, {pipeline_mode = #tpu.pipeline_mode<synchronous>, transform_indices = @transform_4, window_bounds = array<i64: 64, 1>}, {transform_indices = @transform_5, window_bounds = array<i64: 1, 64, 1>}]} {
    %c0_i32 = arith.constant 0 : i32
    %0 = arith.cmpi eq, %arg1, %c0_i32 : i32
    %1 = arith.extui %0 : i1 to i32
    %c0_i32_0 = arith.constant 0 : i32
    %2 = arith.cmpi ne, %1, %c0_i32_0 : i32
    scf.if %2 {
      %cst_14 = arith.constant 0.000000e+00 : f32
      %18 = vector.broadcast %cst_14 : f32 to vector<64x1xf32>
      %c0_15 = arith.constant 0 : index
      %c0_16 = arith.constant 0 : index
      %19 = vector.load %arg8[%c0_15, %c0_16] : memref<64x1xf32, #tpu.memory_space<vmem>>, vector<64x1xf32>
      tpu.vector_store %arg8[%c0_15, %c0_16], %18 {strides = array<i32>} : memref<64x1xf32, #tpu.memory_space<vmem>>, vector<64x1xf32>,
      %cst_17 = arith.constant 0xFF800000 : f32
      %20 = vector.broadcast %cst_17 : f32 to vector<64x1xf32>
      %c0_18 = arith.constant 0 : index
      %c0_19 = arith.constant 0 : index
      %21 = vector.load %arg9[%c0_18, %c0_19] : memref<64x1xf32, #tpu.memory_space<vmem>>, vector<64x1xf32>
      tpu.vector_store %arg9[%c0_18, %c0_19], %20 {strides = array<i32>} : memref<64x1xf32, #tpu.memory_space<vmem>>, vector<64x1xf32>,
    } else {
    }
    %c0 = arith.constant 0 : index
    %c0_1 = arith.constant 0 : index
    %c0_2 = arith.constant 0 : index
    %3 = vector.load %arg2[%c0, %c0_1, %c0_2] : memref<1x64x256xf32, #tpu.memory_space<vmem>>, vector<1x64x256xf32>
    %4 = vector.shape_cast %3 : vector<1x64x256xf32> to vector<64x256xf32>
    %c0_3 = arith.constant 0 : index
    %c0_4 = arith.constant 0 : index
    %5 = vector.load %arg8[%c0_3, %c0_4] : memref<64x1xf32, #tpu.memory_space<vmem>>, vector<64x1xf32>
    %cst = arith.constant dense<0.000000e+00> : vector<64xf32>
    %6 = vector.multi_reduction <add>, %4, %cst [1] : vector<64x256xf32> to vector<64xf32>
    %7 = vector.shape_cast %6 : vector<64xf32> to vector<64x1xf32>
    %8 = arith.addf %5, %7 : vector<64x1xf32>
    %c0_5 = arith.constant 0 : index
    %c0_6 = arith.constant 0 : index
    %9 = vector.load %arg8[%c0_5, %c0_6] : memref<64x1xf32, #tpu.memory_space<vmem>>, vector<64x1xf32>
    tpu.vector_store %arg8[%c0_5, %c0_6], %8 {strides = array<i32>} : memref<64x1xf32, #tpu.memory_space<vmem>>, vector<64x1xf32>,
    %c0_7 = arith.constant 0 : index
    %c0_8 = arith.constant 0 : index
    %10 = vector.load %arg9[%c0_7, %c0_8] : memref<64x1xf32, #tpu.memory_space<vmem>>, vector<64x1xf32>
    %cst_9 = arith.constant dense<0xFF800000> : vector<64xf32>
    %11 = vector.multi_reduction <maximumf>, %4, %cst_9 [1] : vector<64x256xf32> to vector<64xf32>
    %12 = vector.shape_cast %11 : vector<64xf32> to vector<64x1xf32>
    %13 = arith.maximumf %10, %12 : vector<64x1xf32>
    %c0_10 = arith.constant 0 : index
    %c0_11 = arith.constant 0 : index
    %14 = vector.load %arg9[%c0_10, %c0_11] : memref<64x1xf32, #tpu.memory_space<vmem>>, vector<64x1xf32>
    tpu.vector_store %arg9[%c0_10, %c0_11], %13 {strides = array<i32>} : memref<64x1xf32, #tpu.memory_space<vmem>>, vector<64x1xf32>,
    %c0_i32_12 = arith.constant 0 : i32
    %15 = arith.cmpi eq, %arg1, %c0_i32_12 : i32
    %16 = arith.extui %15 : i1 to i32
    %c0_i32_13 = arith.constant 0 : i32
    %17 = arith.cmpi ne, %16, %c0_i32_13 : i32
    scf.if %17 {
      %c0_14 = arith.constant 0 : index
      %c0_15 = arith.constant 0 : index
      %18 = vector.load %arg8[%c0_14, %c0_15] : memref<64x1xf32, #tpu.memory_space<vmem>>, vector<64x1xf32>
      %cst_16 = arith.constant 3.906250e-03 : f32
      %19 = vector.broadcast %cst_16 : f32 to vector<64x1xf32>
      %20 = arith.mulf %18, %19 : vector<64x1xf32>
      %c0_17 = arith.constant 0 : index
      %c0_18 = arith.constant 0 : index
      %21 = vector.load %arg9[%c0_17, %c0_18] : memref<64x1xf32, #tpu.memory_space<vmem>>, vector<64x1xf32>
      %c0_19 = arith.constant 0 : index
      %c0_20 = arith.constant 0 : index
      %22 = vector.load %arg3[%c0_19, %c0_20] : memref<4x64xf32, #tpu.memory_space<vmem>>, vector<4x64xf32>
      %c0_21 = arith.constant 0 : index
      %c0_22 = arith.constant 0 : index
      %23 = vector.load %arg4[%c0_21, %c0_22] : memref<4x1xf32, #tpu.memory_space<vmem>>, vector<4x1xf32>
      %c0_23 = arith.constant 0 : index
      %c0_24 = arith.constant 0 : index
      %24 = vector.load %arg5[%c0_23, %c0_24] : memref<64x4xf32, #tpu.memory_space<vmem>>, vector<64x4xf32>
      %c0_25 = arith.constant 0 : index
      %c0_26 = arith.constant 0 : index
      %25 = vector.load %arg6[%c0_25, %c0_26] : memref<64x1xf32, #tpu.memory_space<vmem>>, vector<64x1xf32>
      %cst_27 = arith.constant dense<0.000000e+00> : vector<4x1xf32>
      %26 = tpu.matmul %22, %20, %cst_27 {dimension_numbers = #tpu.dot_dimension_numbers<[1], [0], [0], [1], [0, 0, 1, 1], [], []>} : vector<4x64xf32>, vector<64x1xf32>, vector<4x1xf32> -> vector<4x1xf32>
      %27 = arith.addf %26, %23 : vector<4x1xf32>
      %cst_28 = arith.constant 0.000000e+00 : f32
      %28 = vector.broadcast %cst_28 : f32 to vector<4x1xf32>
      %29 = arith.cmpf ogt, %27, %28 : vector<4x1xf32>
      %cst_29 = arith.constant 1.000000e-01 : f32
      %30 = vector.broadcast %cst_29 : f32 to vector<4x1xf32>
      %31 = arith.mulf %30, %27 : vector<4x1xf32>
      %32 = arith.select %29, %27, %31 : vector<4x1xi1>, vector<4x1xf32>
      %cst_30 = arith.constant dense<0.000000e+00> : vector<64x1xf32>
      %33 = tpu.matmul %24, %32, %cst_30 {dimension_numbers = #tpu.dot_dimension_numbers<[1], [0], [0], [1], [0, 0, 1, 1], [], []>} : vector<64x4xf32>, vector<4x1xf32>, vector<64x1xf32> -> vector<64x1xf32>
      %34 = arith.addf %33, %25 : vector<64x1xf32>
      %cst_31 = arith.constant dense<0.000000e+00> : vector<4x1xf32>
      %35 = tpu.matmul %22, %21, %cst_31 {dimension_numbers = #tpu.dot_dimension_numbers<[1], [0], [0], [1], [0, 0, 1, 1], [], []>} : vector<4x64xf32>, vector<64x1xf32>, vector<4x1xf32> -> vector<4x1xf32>
      %36 = arith.addf %35, %23 : vector<4x1xf32>
      %cst_32 = arith.constant 0.000000e+00 : f32
      %37 = vector.broadcast %cst_32 : f32 to vector<4x1xf32>
      %38 = arith.cmpf ogt, %36, %37 : vector<4x1xf32>
      %cst_33 = arith.constant 1.000000e-01 : f32
      %39 = vector.broadcast %cst_33 : f32 to vector<4x1xf32>
      %40 = arith.mulf %39, %36 : vector<4x1xf32>
      %41 = arith.select %38, %36, %40 : vector<4x1xi1>, vector<4x1xf32>
      %cst_34 = arith.constant dense<0.000000e+00> : vector<64x1xf32>
      %42 = tpu.matmul %24, %41, %cst_34 {dimension_numbers = #tpu.dot_dimension_numbers<[1], [0], [0], [1], [0, 0, 1, 1], [], []>} : vector<64x4xf32>, vector<4x1xf32>, vector<64x1xf32> -> vector<64x1xf32>
      %43 = arith.addf %42, %25 : vector<64x1xf32>
      %44 = arith.addf %34, %43 : vector<64x1xf32>
      %45 = arith.negf %44 : vector<64x1xf32>
      %46 = math.exp %45 : vector<64x1xf32>
      %cst_35 = arith.constant 1.000000e+00 : f32
      %47 = vector.broadcast %cst_35 : f32 to vector<64x1xf32>
      %48 = arith.addf %47, %46 : vector<64x1xf32>
      %49 = arith.divf %47, %48 : vector<64x1xf32>
      %c0_36 = arith.constant 0 : index
      %c0_37 = arith.constant 0 : index
      %c0_38 = arith.constant 0 : index
      %50 = vector.load %arg7[%c0_36, %c0_37, %c0_38] : memref<1x64x1xf32, #tpu.memory_space<vmem>>, vector<1x64x1xf32>
      %51 = vector.shape_cast %50 : vector<1x64x1xf32> to vector<64x1xf32>
      %52 = vector.shape_cast %49 : vector<64x1xf32> to vector<1x64x1xf32>
      tpu.vector_store %arg7[%c0_36, %c0_37, %c0_38], %52 {strides = array<i32>} : memref<1x64x1xf32, #tpu.memory_space<vmem>>, vector<1x64x1xf32>,
    } else {
    }
    return
  }
  func.func @transform_0(%arg0: i32, %arg1: i32) -> (i32, i32, i32) {
    %c0_i32 = arith.constant 0 : i32
    %c0_i32_0 = arith.constant 0 : i32
    return %arg0, %c0_i32, %arg1 : i32, i32, i32
  }
  func.func @transform_1(%arg0: i32, %arg1: i32) -> (i32, i32) {
    %c0_i32 = arith.constant 0 : i32
    %c0_i32_0 = arith.constant 0 : i32
    %c0_i32_1 = arith.constant 0 : i32
    return %c0_i32, %c0_i32_0 : i32, i32
  }
  func.func @transform_2(%arg0: i32, %arg1: i32) -> (i32, i32) {
    %c0_i32 = arith.constant 0 : i32
    %c0_i32_0 = arith.constant 0 : i32
    %c0_i32_1 = arith.constant 0 : i32
    return %c0_i32, %c0_i32_0 : i32, i32
  }
  func.func @transform_3(%arg0: i32, %arg1: i32) -> (i32, i32) {
    %c0_i32 = arith.constant 0 : i32
    %c0_i32_0 = arith.constant 0 : i32
    %c0_i32_1 = arith.constant 0 : i32
    return %c0_i32, %c0_i32_0 : i32, i32
  }
  func.func @transform_4(%arg0: i32, %arg1: i32) -> (i32, i32) {
    %c0_i32 = arith.constant 0 : i32
    %c0_i32_0 = arith.constant 0 : i32
    %c0_i32_1 = arith.constant 0 : i32
    return %c0_i32, %c0_i32_0 : i32, i32
  }
  func.func @transform_5(%arg0: i32, %arg1: i32) -> (i32, i32, i32) {
    %c0_i32 = arith.constant 0 : i32
    %c0_i32_0 = arith.constant 0 : i32
    %c0_i32_1 = arith.constant 0 : i32
    return %arg0, %c0_i32, %c0_i32_0 : i32, i32, i32
  }
}

</mosaic_0001>

<llo_original>
// kernel: tpu_custom_call.1
$region0: #{tpu_custom_call.1}
  #allocation0 [shape = 'u32[]', space=smem, size = 0x4, offset = 0x4, fixed_abs, tag = 'smem constant byte address 0x4 - core index']
  #allocation1 [shape = 'u32[144,128]{1,0:T(1,128)}', space=vmem, size = 0x12000, scoped, tag = 'internal scratch']
  #allocation2 [shape = 'f32[64,1]{1,0:T(8,128)}', space=vmem, size = 0x8000, scoped, tag = 'scratch operand']
  #allocation3 [shape = 'f32[64,1]{1,0:T(8,128)}', space=vmem, size = 0x8000, scoped, tag = 'scratch operand']
  %s0 = inlined_call_operand.hbm [shape: f32[2,64,256], index: 0, kind: input, shape index: {}]
  %s1 = inlined_call_operand.vmem [shape: f32[4,64], index: 1, kind: input, shape index: {}]
  %s2 = inlined_call_operand.vmem [shape: f32[4,1], index: 2, kind: input, shape index: {}]
  %s3 = inlined_call_operand.vmem [shape: f32[64,4], index: 3, kind: input, shape index: {}]
  %s4 = inlined_call_operand.vmem [shape: f32[64,1], index: 4, kind: input, shape index: {}]
  %s5 = inlined_call_operand.vmem [shape: f32[2,64,1], index: 5, kind: output, shape index: {}]
  %s6 = sld [smem:[#allocation0]]
  $region65: #{tpu_custom_call.1} parent=0
    _
  %s8 = ssub.s32 1, %s6
  %s9 = scalar_select 0, %s8, %s6
  $region1: #{tpu_custom_call.1} parent=0
    #allocation4 [shape = 'u8[131072]{0}', space=vmem, size = 0x20000, scoped, tag = 'input window, operand 0']
    #allocation5 [shape = 's32[2]{0}', space=sflag, size = 0x8, scoped, tag = 'scoped memory for tpu_custom_call.1']
    %10 = vsyncpa [#allocation5], 0
    %s11 = scalar_lea.sflag [#allocation5], 1
    %12 = vsyncpa %s11, 0
    loop: start=0, step=1, limit=4
    $region2: #{tpu_custom_call.1} parent=1 // loop_pre_header
      _
    $region3: #{tpu_custom_call.1} parent=1 // loop_header
      %s14 = sphi 0, %s18
      %p15 = scmp.ge.s32.totalorder %s14, 4
      %s21 = sphi 0, %s33
      %s22 = sphi 0, %s29
      %s23 = sphi 0, %s21
      %s24 = sphi 0, %s22
      %s25 = sphi 0, %s23
      %s26 = sphi 0, %s24
      %s38 = sphi 0, %s40
      %s41 = sphi 0, %s38
      %s42 = sphi 0, %s41
      %s58 = sphi 0, %s42
      %s62 = sphi 0, %s62
      %s64 = sphi 0, %s62
      %s65 = sphi 0, %s64
      %s79 = sphi 0, %s65
      %s83 = sphi 0, %s83
      %s85 = sphi 0, %s83
      %s86 = sphi 0, %s85
      %s100 = sphi 0, %s86
      %s104 = sphi 0, %s104
      %s106 = sphi 0, %s104
      %s107 = sphi 0, %s106
      %s121 = sphi 0, %s107
      %s125 = sphi 0, %s125
      %s127 = sphi 0, %s125
      %s128 = sphi 0, %s127
      %s142 = sphi 0, %s128
      %s148 = sphi 0, %s150
      %s151 = sphi 0, %s148
      %s152 = sphi 0, %s151
      %s168 = sphi 0, %s152
    $region4: #{tpu_custom_call.1} parent=1 // loop_header_branch
      %17 = sbr.rel (%p15) target = $region8
    $region5: #{tpu_custom_call.1} parent=1 // loop_body
      %s19 = ssub.s32 %s14, 1
      %s20 = ssub.s32 %s14, 2
      %s27 = sadd.s32 1, %s22
      %p28 = scmp.ge.s32.totalorder %s27, 1
      %s29 = scalar_select %p28, 0, %s27
      %s30 = sadd.s32 1, %s21
      %s31 = scalar_select %p28, %s30, %s21
      %p32 = scmp.ge.s32.totalorder %s31, 2
      %s33 = scalar_select %p32, 0, %s31
      %s34 = ssub.s32 %s21, %s33
      %s35 = ssub.s32 %s22, %s29
      %s36 = sor.u32 %s34, %s35
      %p37 = scmp.eq.s32.totalorder %s36, 0
      %s39 = sadd.s32 %s38, 1
      %s40 = scalar_select %p37, %s38, %s39
      %p43 = pneg %p37
      %p44 = scmp.eq.s32.totalorder %s14, 1
      %p45 = por %p43, %p44
      %p46 = scmp.ne.s32.totalorder %s38, %s41
      %p47 = scmp.eq.s32.totalorder %s14, 0
      %p48 = por %p46, %p47
      %p49 = scmp.ne.s32.totalorder %s38, %s41
      %p50 = scmp.eq.s32.totalorder %s19, 1
      %p51 = por %p49, %p50
      %p52 = scmp.ne.s32.totalorder %s41, %s42
      %p53 = scmp.eq.s32.totalorder %s19, 0
      %p54 = por %p52, %p53
      %p55 = scmp.ne.s32.totalorder %s41, %s42
      %p56 = scmp.eq.s32.totalorder %s20, 1
      %p57 = por %p55, %p56
      %p59 = scmp.ne.s32.totalorder %s42, %s58
      %p60 = scmp.eq.s32.totalorder %s20, 0
      %p61 = por %p59, %p60
      %s63 = sadd.s32 %s62, 1
      %p66 = scmp.eq.s32.totalorder %s14, 1
      %p67 = scmp.ne.s32.totalorder %s62, %s64
      %p68 = scmp.eq.s32.totalorder %s14, 0
      %p69 = por %p67, %p68
      %p70 = scmp.ne.s32.totalorder %s62, %s64
      %p71 = scmp.eq.s32.totalorder %s19, 1
      %p72 = por %p70, %p71
      %p73 = scmp.ne.s32.totalorder %s64, %s65
      %p74 = scmp.eq.s32.totalorder %s19, 0
      %p75 = por %p73, %p74
      %p76 = scmp.ne.s32.totalorder %s64, %s65
      %p77 = scmp.eq.s32.totalorder %s20, 1
      %p78 = por %p76, %p77
      %p80 = scmp.ne.s32.totalorder %s65, %s79
      %p81 = scmp.eq.s32.totalorder %s20, 0
      %p82 = por %p80, %p81
      %s84 = sadd.s32 %s83, 1
      %p87 = scmp.eq.s32.totalorder %s14, 1
      %p88 = scmp.ne.s32.totalorder %s83, %s85
      %p89 = scmp.eq.s32.totalorder %s14, 0
      %p90 = por %p88, %p89
      %p91 = scmp.ne.s32.totalorder %s83, %s85
      %p92 = scmp.eq.s32.totalorder %s19, 1
      %p93 = por %p91, %p92
      %p94 = scmp.ne.s32.totalorder %s85, %s86
      %p95 = scmp.eq.s32.totalorder %s19, 0
      %p96 = por %p94, %p95
      %p97 = scmp.ne.s32.totalorder %s85, %s86
      %p98 = scmp.eq.s32.totalorder %s20, 1
      %p99 = por %p97, %p98
      %p101 = scmp.ne.s32.totalorder %s86, %s100
      %p102 = scmp.eq.s32.totalorder %s20, 0
      %p103 = por %p101, %p102
      %s105 = sadd.s32 %s104, 1
      %p108 = scmp.eq.s32.totalorder %s14, 1
      %p109 = scmp.ne.s32.totalorder %s104, %s106
      %p110 = scmp.eq.s32.totalorder %s14, 0
      %p111 = por %p109, %p110
      %p112 = scmp.ne.s32.totalorder %s104, %s106
      %p113 = scmp.eq.s32.totalorder %s19, 1
      %p114 = por %p112, %p113
      %p115 = scmp.ne.s32.totalorder %s106, %s107
      %p116 = scmp.eq.s32.totalorder %s19, 0
      %p117 = por %p115, %p116
      %p118 = scmp.ne.s32.totalorder %s106, %s107
      %p119 = scmp.eq.s32.totalorder %s20, 1
      %p120 = por %p118, %p119
      %p122 = scmp.ne.s32.totalorder %s107, %s121
      %p123 = scmp.eq.s32.totalorder %s20, 0
      %p124 = por %p122, %p123
      %s126 = sadd.s32 %s125, 1
      %p129 = scmp.eq.s32.totalorder %s14, 1
      %p130 = scmp.ne.s32.totalorder %s125, %s127
      %p131 = scmp.eq.s32.totalorder %s14, 0
      %p132 = por %p130, %p131
      %p133 = scmp.ne.s32.totalorder %s125, %s127
      %p134 = scmp.eq.s32.totalorder %s19, 1
      %p135 = por %p133, %p134
      %p136 = scmp.ne.s32.totalorder %s127, %s128
      %p137 = scmp.eq.s32.totalorder %s19, 0
      %p138 = por %p136, %p137
      %p139 = scmp.ne.s32.totalorder %s127, %s128
      %p140 = scmp.eq.s32.totalorder %s20, 1
      %p141 = por %p139, %p140
      %p143 = scmp.ne.s32.totalorder %s128, %s142
      %p144 = scmp.eq.s32.totalorder %s20, 0
      %p145 = por %p143, %p144
      %s146 = ssub.s32 %s21, %s33
      %p147 = scmp.eq.s32.totalorder %s146, 0
      %s149 = sadd.s32 %s148, 1
      %s150 = scalar_select %p147, %s148, %s149
      %p153 = pneg %p147
      %p154 = scmp.eq.s32.totalorder %s14, 1
      %p155 = por %p153, %p154
      %p156 = scmp.ne.s32.totalorder %s148, %s151
      %p157 = scmp.eq.s32.totalorder %s14, 0
      %p158 = por %p156, %p157
      %p159 = scmp.ne.s32.totalorder %s148, %s151
      %p160 = scmp.eq.s32.totalorder %s19, 1
      %p161 = por %p159, %p160
      %p162 = scmp.ne.s32.totalorder %s151, %s152
      %p163 = scmp.eq.s32.totalorder %s19, 0
      %p164 = por %p162, %p163
      %p165 = scmp.ne.s32.totalorder %s151, %s152
      %p166 = scmp.eq.s32.totalorder %s20, 1
      %p167 = por %p165, %p166
      %p169 = scmp.ne.s32.totalorder %s152, %s168
      %p170 = scmp.eq.s32.totalorder %s20, 0
      %p171 = por %p169, %p170
      %p172 = scmp.le.s32.totalorder 1, %s14
      %p173 = scmp.lt.s32.totalorder %s14, 3
      %p174 = pnand %p172, %p173
      %p175 = pneg %p174
      // Predicated region
      $region9: #{tpu_custom_call.1} parent=5 // pred_check
        _
      $region10: #{tpu_custom_call.1} parent=5 // pred_check_branch
        %177 = sbr.rel (%p174) target = $region12
      $region11: #{tpu_custom_call.1} parent=5 // pred_region
        %s178 = ssub.s32 %s14, 1
        // Predicated region
        $region13: #{tpu_custom_call.1} parent=11 // pred_check
          %p179 = pneg %p75
        $region14: #{tpu_custom_call.1} parent=11 // pred_check_branch
          %181 = sbr.rel (%p179) target = $region16
        $region15: #{tpu_custom_call.1} parent=11 // pred_region
          _
        $region16: #{tpu_custom_call.1} parent=11 // pred_fallthru
          _
        // Predicated region
        $region17: #{tpu_custom_call.1} parent=11 // pred_check
          %p182 = pneg %p96
        $region18: #{tpu_custom_call.1} parent=11 // pred_check_branch
          %184 = sbr.rel (%p182) target = $region20
        $region19: #{tpu_custom_call.1} parent=11 // pred_region
          _
        $region20: #{tpu_custom_call.1} parent=11 // pred_fallthru
          _
        // Predicated region
        $region21: #{tpu_custom_call.1} parent=11 // pred_check
          %p185 = pneg %p117
        $region22: #{tpu_custom_call.1} parent=11 // pred_check_branch
          %187 = sbr.rel (%p185) target = $region24
        $region23: #{tpu_custom_call.1} parent=11 // pred_region
          _
        $region24: #{tpu_custom_call.1} parent=11 // pred_fallthru
          _
        // Predicated region
        $region25: #{tpu_custom_call.1} parent=11 // pred_check
          %p188 = pneg %p138
        $region26: #{tpu_custom_call.1} parent=11 // pred_check_branch
          %190 = sbr.rel (%p188) target = $region28
        $region27: #{tpu_custom_call.1} parent=11 // pred_region
          _
        $region28: #{tpu_custom_call.1} parent=11 // pred_fallthru
          _
      $region12: #{tpu_custom_call.1} parent=5 // pred_fallthru
        _
      %p191 = scmp.lt.s32.totalorder %s14, 2
      // Predicated region
      $region29: #{tpu_custom_call.1} parent=5 // pred_check
        %p192 = pneg %p191
      $region30: #{tpu_custom_call.1} parent=5 // pred_check_branch
        %194 = sbr.rel (%p192) target = $region32
      $region31: #{tpu_custom_call.1} parent=5 // pred_region
        // Predicated region
        $region33: #{tpu_custom_call.1} parent=31 // pred_check
          %p195 = pneg %p48
        $region34: #{tpu_custom_call.1} parent=31 // pred_check_branch
          %197 = sbr.rel (%p195) target = $region36
        $region35: #{tpu_custom_call.1} parent=31 // pred_region
          %s198 = sand.u32 %s38, 1
          %s199 = scalar_lea.sflag [#allocation5], %s198
          %s200 = sand.u32 %s38, 1
          %s201 = smul.addr %s200, 128
          %s202 = scalar_lea.vmem [#allocation4], %s201
          %s203 = smul.u32 2, %s22
          %s205 = ssub.s32 2048, 2048
          %206 = vsyncadd %s199, %s205
          %s207 = smul.addr %s21, 16
          %s208 = sadd.s32 %s203, %s207
          %s209 = smul.addr %s208, 128
          %s210 = scalar_lea.hbm %s0, %s209
          %s211 = sshll.u32 %s202, 4
          %s212 = int_to_ptr.vmem [resolvable:$true] %s211
          %217 = dma.hbm_to_vmem [thread:$0]  %s210, 2048, %s212, %s199, 256, 256, 16
        $region36: #{tpu_custom_call.1} parent=31 // pred_fallthru
          _
      $region32: #{tpu_custom_call.1} parent=5 // pred_fallthru
        _
      %p218 = scmp.le.s32.totalorder 1, %s14
      %p219 = scmp.lt.s32.totalorder %s14, 3
      %p220 = pnand %p218, %p219
      %p221 = pneg %p220
      // Predicated region
      $region37: #{tpu_custom_call.1} parent=5 // pred_check
        _
      $region38: #{tpu_custom_call.1} parent=5 // pred_check_branch
        %223 = sbr.rel (%p220) target = $region40
      $region39: #{tpu_custom_call.1} parent=5 // pred_region
        %s224 = ssub.s32 %s14, 1
        %s225 = sand.u32 %s41, 1
        %s226 = scalar_lea.sflag [#allocation5], %s225
        %s227 = sand.u32 %s41, 1
        %s228 = smul.addr %s227, 128
        %s229 = scalar_lea.vmem [#allocation4], %s228
        // Predicated region
        $region41: #{tpu_custom_call.1} parent=39 // pred_check
          %p230 = pneg %p54
        $region42: #{tpu_custom_call.1} parent=39 // pred_check_branch
          %232 = sbr.rel (%p230) target = $region44
        $region43: #{tpu_custom_call.1} parent=39 // pred_region
          %233 = dma.done %s226, 2048
        $region44: #{tpu_custom_call.1} parent=39 // pred_fallthru
          _
        %s234 = sand.u32 %s41, 1
        %s235 = scalar_lea.sflag [#allocation5], %s234
        %s236 = sand.u32 %s41, 1
        %s237 = smul.addr %s236, 128
        %s238 = scalar_lea.vmem [#allocation4], %s237
        %p239 = pneg %p54
        %p240 = pneg %p51
        %p241 = pneg %p75
        %p242 = pneg %p72
        %p243 = pneg %p96
        %p244 = pneg %p93
        %p245 = pneg %p117
        %p246 = pneg %p114
        %p247 = pneg %p138
        %p248 = pneg %p135
        %p249 = pneg %p164
        %p250 = pneg %p161
        %p251 = scmp.lt.s32.totalorder %s23, 1
        %s252 = scalar_select %p251, %s23, 1
        %s253 = smul.addr %s252, 8
        %s254 = smul.addr %s253, 8
        %s255 = scalar_lea.vmem %s5, %s254
        %s256 = smul.u32 2, %s24
        %p257 = scmp.lt.s32.totalorder %s23, 1
        %s258 = scalar_select %p257, %s23, 1
        %s259 = smul.addr %s258, 8
        %s260 = smul.addr %s259, 8
        %s261 = scalar_lea.vmem %s5, %s260
        %p262 = scmp.eq.s32.totalorder %s24, 0
        // Predicated region
        $region45: #{tpu_custom_call.1} parent=39 // pred_check
          %p263 = pneg %p262
        $region46: #{tpu_custom_call.1} parent=39 // pred_check_branch
          %265 = sbr.rel (%p263) target = $region48
        $region47: #{tpu_custom_call.1} parent=39 // pred_region
          %vm266 = vcmask 7168
          %267 = vst.msk [vmem:[#allocation2] sm:$0xff] %vm266, 0.0
          %268 = vst.msk [vmem:[#allocation2 + $0x8] sm:$0xff] %vm266, 0.0
          %269 = vst.msk [vmem:[#allocation2 + $0x10] sm:$0xff] %vm266, 0.0
          %270 = vst.msk [vmem:[#allocation2 + $0x18] sm:$0xff] %vm266, 0.0
          %271 = vst.msk [vmem:[#allocation2 + $0x20] sm:$0xff] %vm266, 0.0
          %272 = vst.msk [vmem:[#allocation2 + $0x28] sm:$0xff] %vm266, 0.0
          %273 = vst.msk [vmem:[#allocation2 + $0x30] sm:$0xff] %vm266, 0.0
          %274 = vst.msk [vmem:[#allocation2 + $0x38] sm:$0xff] %vm266, 0.0
          %275 = vst.msk [vmem:[#allocation3] sm:$0xff] %vm266, -inf
          %276 = vst.msk [vmem:[#allocation3 + $0x8] sm:$0xff] %vm266, -inf
          %277 = vst.msk [vmem:[#allocation3 + $0x10] sm:$0xff] %vm266, -inf
          %278 = vst.msk [vmem:[#allocation3 + $0x18] sm:$0xff] %vm266, -inf
          %279 = vst.msk [vmem:[#allocation3 + $0x20] sm:$0xff] %vm266, -inf
          %280 = vst.msk [vmem:[#allocation3 + $0x28] sm:$0xff] %vm266, -inf
          %281 = vst.msk [vmem:[#allocation3 + $0x30] sm:$0xff] %vm266, -inf
          %282 = vst.msk [vmem:[#allocation3 + $0x38] sm:$0xff] %vm266, -inf
        $region48: #{tpu_custom_call.1} parent=39 // pred_fallthru
          _
        %v283 = vld [vmem:[%s229] sm:$0xff]
        %v284 = vld [vmem:[%s229 + $0x8] sm:$0xff]
        %v285 = vld [vmem:[%s229 + $0x10] sm:$0xff]
        %v286 = vld [vmem:[%s229 + $0x18] sm:$0xff]
        %v287 = vld [vmem:[%s229 + $0x20] sm:$0xff]
        %v288 = vld [vmem:[%s229 + $0x28] sm:$0xff]
        %v289 = vld [vmem:[%s229 + $0x30] sm:$0xff]
        %v290 = vld [vmem:[%s229 + $0x38] sm:$0xff]
        %v291 = vld [vmem:[%s229 + $0x40] sm:$0xff]
        %v292 = vld [vmem:[%s229 + $0x48] sm:$0xff]
        %v293 = vld [vmem:[%s229 + $0x50] sm:$0xff]
        %v294 = vld [vmem:[%s229 + $0x58] sm:$0xff]
        %v295 = vld [vmem:[%s229 + $0x60] sm:$0xff]
        %v296 = vld [vmem:[%s229 + $0x68] sm:$0xff]
        %v297 = vld [vmem:[%s229 + $0x70] sm:$0xff]
        %v298 = vld [vmem:[%s229 + $0x78] sm:$0xff]
        %v299 = vld [vmem:[#allocation2] sm:$0xff]
        %v300 = vld [vmem:[#allocation2 + $0x8] sm:$0xff]
        %v301 = vld [vmem:[#allocation2 + $0x10] sm:$0xff]
        %v302 = vld [vmem:[#allocation2 + $0x18] sm:$0xff]
        %v303 = vld [vmem:[#allocation2 + $0x20] sm:$0xff]
        %v304 = vld [vmem:[#allocation2 + $0x28] sm:$0xff]
        %v305 = vld [vmem:[#allocation2 + $0x30] sm:$0xff]
        %v306 = vld [vmem:[#allocation2 + $0x38] sm:$0xff]
        %v307 = vadd.f32 %v283, %v284
        %308 = vadd.xlane.f32.xlu0 %v307
        %v309 = vpop.xlane.xlu0 %308
        %v310 = vadd.f32 %v285, %v286
        %311 = vadd.xlane.f32.xlu0 %v310
        %v312 = vpop.xlane.xlu0 %311
        %v313 = vadd.f32 %v287, %v288
        %314 = vadd.xlane.f32.xlu0 %v313
        %v315 = vpop.xlane.xlu0 %314
        %v316 = vadd.f32 %v289, %v290
        %317 = vadd.xlane.f32.xlu0 %v316
        %v318 = vpop.xlane.xlu0 %317
        %v319 = vadd.f32 %v291, %v292
        %320 = vadd.xlane.f32.xlu0 %v319
        %v321 = vpop.xlane.xlu0 %320
        %v322 = vadd.f32 %v293, %v294
        %323 = vadd.xlane.f32.xlu0 %v322
        %v324 = vpop.xlane.xlu0 %323
        %v325 = vadd.f32 %v295, %v296
        %326 = vadd.xlane.f32.xlu0 %v325
        %v327 = vpop.xlane.xlu0 %326
        %v328 = vadd.f32 %v297, %v298
        %329 = vadd.xlane.f32.xlu0 %v328
        %v330 = vpop.xlane.xlu0 %329
        %v331 = vadd.f32 %v299, %v309
        %v332 = vadd.f32 %v300, %v312
        %v333 = vadd.f32 %v301, %v315
        %v334 = vadd.f32 %v302, %v318
        %v335 = vadd.f32 %v303, %v321
        %v336 = vadd.f32 %v304, %v324
        %v337 = vadd.f32 %v305, %v327
        %v338 = vadd.f32 %v306, %v330
        %vm339 = vcmask 7168
        %340 = vst.msk [vmem:[#allocation2] sm:$0xff] %vm339, %v331
        %341 = vst.msk [vmem:[#allocation2 + $0x8] sm:$0xff] %vm339, %v332
        %342 = vst.msk [vmem:[#allocation2 + $0x10] sm:$0xff] %vm339, %v333
        %343 = vst.msk [vmem:[#allocation2 + $0x18] sm:$0xff] %vm339, %v334
        %344 = vst.msk [vmem:[#allocation2 + $0x20] sm:$0xff] %vm339, %v335
        %345 = vst.msk [vmem:[#allocation2 + $0x28] sm:$0xff] %vm339, %v336
        %346 = vst.msk [vmem:[#allocation2 + $0x30] sm:$0xff] %vm339, %v337
        %347 = vst.msk [vmem:[#allocation2 + $0x38] sm:$0xff] %vm339, %v338
        %v348 = vld [vmem:[#allocation3] sm:$0xff]
        %v349 = vld [vmem:[#allocation3 + $0x8] sm:$0xff]
        %v350 = vld [vmem:[#allocation3 + $0x10] sm:$0xff]
        %v351 = vld [vmem:[#allocation3 + $0x18] sm:$0xff]
        %v352 = vld [vmem:[#allocation3 + $0x20] sm:$0xff]
        %v353 = vld [vmem:[#allocation3 + $0x28] sm:$0xff]
        %v354 = vld [vmem:[#allocation3 + $0x30] sm:$0xff]
        %v355 = vld [vmem:[#allocation3 + $0x38] sm:$0xff]
        %v356 = vmax.f32 %v283, %v284
        %357 = vmax.xlane.f32.xlu0 %v356
        %v358 = vpop.xlane.xlu0 %357
        %v359 = vmax.f32 %v285, %v286
        %360 = vmax.xlane.f32.xlu0 %v359
        %v361 = vpop.xlane.xlu0 %360
        %v362 = vmax.f32 %v287, %v288
        %363 = vmax.xlane.f32.xlu0 %v362
        %v364 = vpop.xlane.xlu0 %363
        %v365 = vmax.f32 %v289, %v290
        %366 = vmax.xlane.f32.xlu0 %v365
        %v367 = vpop.xlane.xlu0 %366
        %v368 = vmax.f32 %v291, %v292
        %369 = vmax.xlane.f32.xlu0 %v368
        %v370 = vpop.xlane.xlu0 %369
        %v371 = vmax.f32 %v293, %v294
        %372 = vmax.xlane.f32.xlu0 %v371
        %v373 = vpop.xlane.xlu0 %372
        %v374 = vmax.f32 %v295, %v296
        %375 = vmax.xlane.f32.xlu0 %v374
        %v376 = vpop.xlane.xlu0 %375
        %v377 = vmax.f32 %v297, %v298
        %378 = vmax.xlane.f32.xlu0 %v377
        %v379 = vpop.xlane.xlu0 %378
        %v380 = vmax.f32 %v348, %v358
        %v381 = vmax.f32 %v349, %v361
        %v382 = vmax.f32 %v350, %v364
        %v383 = vmax.f32 %v351, %v367
        %v384 = vmax.f32 %v352, %v370
        %v385 = vmax.f32 %v353, %v373
        %v386 = vmax.f32 %v354, %v376
        %v387 = vmax.f32 %v355, %v379
        %388 = vst.msk [vmem:[#allocation3] sm:$0xff] %vm339, %v380
        %389 = vst.msk [vmem:[#allocation3 + $0x8] sm:$0xff] %vm339, %v381
        %390 = vst.msk [vmem:[#allocation3 + $0x10] sm:$0xff] %vm339, %v382
        %391 = vst.msk [vmem:[#allocation3 + $0x18] sm:$0xff] %vm339, %v383
        %392 = vst.msk [vmem:[#allocation3 + $0x20] sm:$0xff] %vm339, %v384
        %393 = vst.msk [vmem:[#allocation3 + $0x28] sm:$0xff] %vm339, %v385
        %394 = vst.msk [vmem:[#allocation3 + $0x30] sm:$0xff] %vm339, %v386
        %395 = vst.msk [vmem:[#allocation3 + $0x38] sm:$0xff] %vm339, %v387
        // Predicated region
        $region49: #{tpu_custom_call.1} parent=39 // pred_check
          %p396 = pneg %p262
        $region50: #{tpu_custom_call.1} parent=39 // pred_check_branch
          %398 = sbr.rel (%p396) target = $region52
        $region51: #{tpu_custom_call.1} parent=39 // pred_region
          %v399 = vld [vmem:[#allocation2] sm:$0xff]
          %v400 = vld [vmem:[#allocation2 + $0x8] sm:$0xff]
          %v401 = vld [vmem:[#allocation2 + $0x10] sm:$0xff]
          %v402 = vld [vmem:[#allocation2 + $0x18] sm:$0xff]
          %v403 = vld [vmem:[#allocation2 + $0x20] sm:$0xff]
          %v404 = vld [vmem:[#allocation2 + $0x28] sm:$0xff]
          %v405 = vld [vmem:[#allocation2 + $0x30] sm:$0xff]
          %v406 = vld [vmem:[#allocation2 + $0x38] sm:$0xff]
          %v407 = vmul.f32 %v399, 0.00390625
          %v408 = vmul.f32 %v400, 0.00390625
          %v409 = vmul.f32 %v401, 0.00390625
          %v410 = vmul.f32 %v402, 0.00390625
          %v411 = vmul.f32 %v403, 0.00390625
          %v412 = vmul.f32 %v404, 0.00390625
          %v413 = vmul.f32 %v405, 0.00390625
          %v414 = vmul.f32 %v406, 0.00390625
          %v415 = vld [vmem:[#allocation3] sm:$0xff]
          %v416 = vld [vmem:[#allocation3 + $0x8] sm:$0xff]
          %v417 = vld [vmem:[#allocation3 + $0x10] sm:$0xff]
          %v418 = vld [vmem:[#allocation3 + $0x18] sm:$0xff]
          %v419 = vld [vmem:[#allocation3 + $0x20] sm:$0xff]
          %v420 = vld [vmem:[#allocation3 + $0x28] sm:$0xff]
          %v421 = vld [vmem:[#allocation3 + $0x30] sm:$0xff]
          %v422 = vld [vmem:[#allocation3 + $0x38] sm:$0xff]
          %v423 = vld [vmem:[%s1] sm:$0xf]
          %v424 = vld [vmem:[%s2] sm:$0xf]
          %v425 = vld [vmem:[%s3] sm:$0xff]
          %v426 = vld [vmem:[%s3 + $0x8] sm:$0xff]
          %v427 = vld [vmem:[%s3 + $0x10] sm:$0xff]
          %v428 = vld [vmem:[%s3 + $0x18] sm:$0xff]
          %v429 = vld [vmem:[%s3 + $0x20] sm:$0xff]
          %v430 = vld [vmem:[%s3 + $0x28] sm:$0xff]
          %v431 = vld [vmem:[%s3 + $0x30] sm:$0xff]
          %v432 = vld [vmem:[%s3 + $0x38] sm:$0xff]
          %v433 = vld [vmem:[%s4] sm:$0xff]
          %v434 = vld [vmem:[%s4 + $0x8] sm:$0xff]
          %v435 = vld [vmem:[%s4 + $0x10] sm:$0xff]
          %v436 = vld [vmem:[%s4 + $0x18] sm:$0xff]
          %v437 = vld [vmem:[%s4 + $0x20] sm:$0xff]
          %v438 = vld [vmem:[%s4 + $0x28] sm:$0xff]
          %v439 = vld [vmem:[%s4 + $0x30] sm:$0xff]
          %v440 = vld [vmem:[%s4 + $0x38] sm:$0xff]
          %vm441 = vcmask 523264
          %v443 = vsel %vm441, %v423, 0
          %445 = vmatprep.subr.mxu0 0.0
          %446 = vmatpush1.msra.mxu0 %v407
          %447 = vmatprep.subr.mxu0 0.0
          %448 = vmatpush1.msra.mxu0 %v408
          %449 = vmatprep.subr.mxu0 0.0
          %450 = vmatpush1.msra.mxu0 %v409
          %451 = vmatprep.subr.mxu0 0.0
          %452 = vmatpush1.msra.mxu0 %v410
          %453 = vmatprep.subr.mxu0 0.0
          %454 = vmatpush1.msra.mxu0 %v411
          %455 = vmatprep.subr.mxu0 0.0
          %456 = vmatpush1.msra.mxu0 %v412
          %457 = vmatprep.subr.mxu0 0.0
          %458 = vmatpush1.msra.mxu0 %v413
          %459 = vmatprep.subr.mxu0 0.0
          %460 = vmatpush1.msra.mxu0 %v414
          %461 = vmatprep.subr.mxu0 0.0
          %462 = vmatpush1.msra.mxu0 0.0
          %463 = vmatprep.subr.mxu0 0.0
          %464 = vmatpush1.msra.mxu0 0.0
          %465 = vmatprep.subr.mxu0 0.0
          %466 = vmatpush1.msra.mxu0 0.0
          %467 = vmatprep.subr.mxu0 0.0
          %468 = vmatpush1.msra.mxu0 0.0
          %469 = vmatprep.subr.mxu0 0.0
          %470 = vmatpush1.msra.mxu0 0.0
          %471 = vmatprep.subr.mxu0 0.0
          %472 = vmatpush1.msra.mxu0 0.0
          %473 = vmatprep.subr.mxu0 0.0
          %474 = vmatpush1.msra.mxu0 0.0
          %475 = vmatprep.subr.mxu0 0.0
          %476 = vmatpush1.msra.mxu0 0.0
          %477 = vmatprep.subr.mxu0 0.0
          %478 = vmatpush1.msra.mxu0 0.0
          %479 = vmatprep.subr.mxu0 0.0
          %480 = vmatpush1.msra.mxu0 0.0
          %481 = vmatprep.subr.mxu0 0.0
          %482 = vmatpush1.msra.mxu0 0.0
          %483 = vmatprep.subr.mxu0 0.0
          %484 = vmatpush1.msra.mxu0 0.0
          %485 = vmatprep.subr.mxu0 0.0
          %486 = vmatpush1.msra.mxu0 0.0
          %487 = vmatprep.subr.mxu0 0.0
          %488 = vmatpush1.msra.mxu0 0.0
          %489 = vmatprep.subr.mxu0 0.0
          %490 = vmatpush1.msra.mxu0 0.0
          %491 = vmatprep.subr.mxu0 0.0
          %492 = vmatpush1.msra.mxu0 0.0
          %493 = vmatprep.subr.mxu0 0.0
          %494 = vmatpush1.msra.mxu0 0.0
          %495 = vmatprep.subr.mxu0 0.0
          %496 = vmatpush1.msra.mxu0 0.0
          %497 = vmatprep.subr.mxu0 0.0
          %498 = vmatpush1.msra.mxu0 0.0
          %499 = vmatprep.subr.mxu0 0.0
          %500 = vmatpush1.msra.mxu0 0.0
          %501 = vmatprep.subr.mxu0 0.0
          %502 = vmatpush1.msra.mxu0 0.0
          %503 = vmatprep.subr.mxu0 0.0
          %504 = vmatpush1.msra.mxu0 0.0
          %505 = vmatprep.subr.mxu0 0.0
          %506 = vmatpush1.msra.mxu0 0.0
          %507 = vmatprep.subr.mxu0 0.0
          %508 = vmatpush1.msra.mxu0 0.0
          %509 = vmatprep.mubr.f32.mxu0 0.0
          %510 = vmatmul.mubr.f32.gmra.mrb[0].mxu0 %v443
          %v511 = vpop.f32.mrb[0].mxu0
          %v512 = vadd.f32 %v424, %v511
          %v513 = vpop.f32.mrb[0].mxu0
          %514 = vdwg.mxu0
          %vm515 = vcmp.gt.f32.partialorder %v512, 0.0
          %v516 = vmul.f32 %v512, 0.1
          %v517 = vsel %vm515, %v512, %v516
          %vm518 = vcmask 31744
          %v520 = vsel %vm518, %v425, 0
          %v523 = vsel %vm518, %v426, 0
          %v526 = vsel %vm518, %v427, 0
          %v529 = vsel %vm518, %v428, 0
          %v532 = vsel %vm518, %v429, 0
          %v535 = vsel %vm518, %v430, 0
          %v538 = vsel %vm518, %v431, 0
          %v541 = vsel %vm518, %v432, 0
          %vm543 = vcmask 1043456
          %v545 = vsel %vm543, %v517, 0
          %547 = vmatprep.subr.mxu0 0.0
          %548 = vmatpush1.msra.mxu0 %v545
          %549 = vmatprep.subr.mxu0 0.0
          %550 = vmatpush1.msra.mxu0 0.0
          %551 = vmatprep.subr.mxu0 0.0
          %552 = vmatpush1.msra.mxu0 0.0
          %553 = vmatprep.subr.mxu0 0.0
          %554 = vmatpush1.msra.mxu0 0.0
          %555 = vmatprep.subr.mxu0 0.0
          %556 = vmatpush1.msra.mxu0 0.0
          %557 = vmatprep.subr.mxu0 0.0
          %558 = vmatpush1.msra.mxu0 0.0
          %559 = vmatprep.subr.mxu0 0.0
          %560 = vmatpush1.msra.mxu0 0.0
          %561 = vmatprep.subr.mxu0 0.0
          %562 = vmatpush1.msra.mxu0 0.0
          %563 = vmatprep.subr.mxu0 0.0
          %564 = vmatpush1.msra.mxu0 0.0
          %565 = vmatprep.subr.mxu0 0.0
          %566 = vmatpush1.msra.mxu0 0.0
          %567 = vmatprep.subr.mxu0 0.0
          %568 = vmatpush1.msra.mxu0 0.0
          %569 = vmatprep.subr.mxu0 0.0
          %570 = vmatpush1.msra.mxu0 0.0
          %571 = vmatprep.subr.mxu0 0.0
          %572 = vmatpush1.msra.mxu0 0.0
          %573 = vmatprep.subr.mxu0 0.0
          %574 = vmatpush1.msra.mxu0 0.0
          %575 = vmatprep.subr.mxu0 0.0
          %576 = vmatpush1.msra.mxu0 0.0
          %577 = vmatprep.subr.mxu0 0.0
          %578 = vmatpush1.msra.mxu0 0.0
          %579 = vmatprep.subr.mxu0 0.0
          %580 = vmatpush1.msra.mxu0 0.0
          %581 = vmatprep.subr.mxu0 0.0
          %582 = vmatpush1.msra.mxu0 0.0
          %583 = vmatprep.subr.mxu0 0.0
          %584 = vmatpush1.msra.mxu0 0.0
          %585 = vmatprep.subr.mxu0 0.0
          %586 = vmatpush1.msra.mxu0 0.0
          %587 = vmatprep.subr.mxu0 0.0
          %588 = vmatpush1.msra.mxu0 0.0
          %589 = vmatprep.subr.mxu0 0.0
          %590 = vmatpush1.msra.mxu0 0.0
          %591 = vmatprep.subr.mxu0 0.0
          %592 = vmatpush1.msra.mxu0 0.0
          %593 = vmatprep.subr.mxu0 0.0
          %594 = vmatpush1.msra.mxu0 0.0
          %595 = vmatprep.subr.mxu0 0.0
          %596 = vmatpush1.msra.mxu0 0.0
          %597 = vmatprep.subr.mxu0 0.0
          %598 = vmatpush1.msra.mxu0 0.0
          %599 = vmatprep.subr.mxu0 0.0
          %600 = vmatpush1.msra.mxu0 0.0
          %601 = vmatprep.subr.mxu0 0.0
          %602 = vmatpush1.msra.mxu0 0.0
          %603 = vmatprep.subr.mxu0 0.0
          %604 = vmatpush1.msra.mxu0 0.0
          %605 = vmatprep.subr.mxu0 0.0
          %606 = vmatpush1.msra.mxu0 0.0
          %607 = vmatprep.subr.mxu0 0.0
          %608 = vmatpush1.msra.mxu0 0.0
          %609 = vmatprep.subr.mxu0 0.0
          %610 = vmatpush1.msra.mxu0 0.0
          %611 = vmatprep.mubr.f32.mxu0 0.0
          %612 = vmatmul.mubr.f32.gmra.mrb[0].mxu0 %v520
          %v613 = vpop.f32.mrb[0].mxu0
          %v614 = vadd.f32 %v433, %v613
          %v615 = vpop.f32.mrb[0].mxu0
          %616 = vmatprep.mubr.f32.mxu0 0.0
          %617 = vmatmul.mubr.f32.gmra.mrb[0].mxu0 %v523
          %v618 = vpop.f32.mrb[0].mxu0
          %v619 = vadd.f32 %v434, %v618
          %v620 = vpop.f32.mrb[0].mxu0
          %621 = vmatprep.mubr.f32.mxu0 0.0
          %622 = vmatmul.mubr.f32.gmra.mrb[0].mxu0 %v526
          %v623 = vpop.f32.mrb[0].mxu0
          %v624 = vadd.f32 %v435, %v623
          %v625 = vpop.f32.mrb[0].mxu0
          %626 = vmatprep.mubr.f32.mxu0 0.0
          %627 = vmatmul.mubr.f32.gmra.mrb[0].mxu0 %v529
          %v628 = vpop.f32.mrb[0].mxu0
          %v629 = vadd.f32 %v436, %v628
          %v630 = vpop.f32.mrb[0].mxu0
          %631 = vmatprep.mubr.f32.mxu0 0.0
          %632 = vmatmul.mubr.f32.gmra.mrb[0].mxu0 %v532
          %v633 = vpop.f32.mrb[0].mxu0
          %v634 = vadd.f32 %v437, %v633
          %v635 = vpop.f32.mrb[0].mxu0
          %636 = vmatprep.mubr.f32.mxu0 0.0
          %637 = vmatmul.mubr.f32.gmra.mrb[0].mxu0 %v535
          %v638 = vpop.f32.mrb[0].mxu0
          %v639 = vadd.f32 %v438, %v638
          %v640 = vpop.f32.mrb[0].mxu0
          %641 = vmatprep.mubr.f32.mxu0 0.0
          %642 = vmatmul.mubr.f32.gmra.mrb[0].mxu0 %v538
          %v643 = vpop.f32.mrb[0].mxu0
          %v644 = vadd.f32 %v439, %v643
          %v645 = vpop.f32.mrb[0].mxu0
          %646 = vmatprep.mubr.f32.mxu0 0.0
          %647 = vmatmul.mubr.f32.gmra.mrb[0].mxu0 %v541
          %v648 = vpop.f32.mrb[0].mxu0
          %v649 = vadd.f32 %v440, %v648
          %v650 = vpop.f32.mrb[0].mxu0
          %651 = vdwg.mxu0
          %652 = vmatprep.subr.mxu0 0.0
          %653 = vmatpush1.msra.mxu0 %v415
          %654 = vmatprep.subr.mxu0 0.0
          %655 = vmatpush1.msra.mxu0 %v416
          %656 = vmatprep.subr.mxu0 0.0
          %657 = vmatpush1.msra.mxu0 %v417
          %658 = vmatprep.subr.mxu0 0.0
          %659 = vmatpush1.msra.mxu0 %v418
          %660 = vmatprep.subr.mxu0 0.0
          %661 = vmatpush1.msra.mxu0 %v419
          %662 = vmatprep.subr.mxu0 0.0
          %663 = vmatpush1.msra.mxu0 %v420
          %664 = vmatprep.subr.mxu0 0.0
          %665 = vmatpush1.msra.mxu0 %v421
          %666 = vmatprep.subr.mxu0 0.0
          %667 = vmatpush1.msra.mxu0 %v422
          %668 = vmatprep.subr.mxu0 0.0
          %669 = vmatpush1.msra.mxu0 0.0
          %670 = vmatprep.subr.mxu0 0.0
          %671 = vmatpush1.msra.mxu0 0.0
          %672 = vmatprep.subr.mxu0 0.0
          %673 = vmatpush1.msra.mxu0 0.0
          %674 = vmatprep.subr.mxu0 0.0
          %675 = vmatpush1.msra.mxu0 0.0
          %676 = vmatprep.subr.mxu0 0.0
          %677 = vmatpush1.msra.mxu0 0.0
          %678 = vmatprep.subr.mxu0 0.0
          %679 = vmatpush1.msra.mxu0 0.0
          %680 = vmatprep.subr.mxu0 0.0
          %681 = vmatpush1.msra.mxu0 0.0
          %682 = vmatprep.subr.mxu0 0.0
          %683 = vmatpush1.msra.mxu0 0.0
          %684 = vmatprep.subr.mxu0 0.0
          %685 = vmatpush1.msra.mxu0 0.0
          %686 = vmatprep.subr.mxu0 0.0
          %687 = vmatpush1.msra.mxu0 0.0
          %688 = vmatprep.subr.mxu0 0.0
          %689 = vmatpush1.msra.mxu0 0.0
          %690 = vmatprep.subr.mxu0 0.0
          %691 = vmatpush1.msra.mxu0 0.0
          %692 = vmatprep.subr.mxu0 0.0
          %693 = vmatpush1.msra.mxu0 0.0
          %694 = vmatprep.subr.mxu0 0.0
          %695 = vmatpush1.msra.mxu0 0.0
          %696 = vmatprep.subr.mxu0 0.0
          %697 = vmatpush1.msra.mxu0 0.0
          %698 = vmatprep.subr.mxu0 0.0
          %699 = vmatpush1.msra.mxu0 0.0
          %700 = vmatprep.subr.mxu0 0.0
          %701 = vmatpush1.msra.mxu0 0.0
          %702 = vmatprep.subr.mxu0 0.0
          %703 = vmatpush1.msra.mxu0 0.0
          %704 = vmatprep.subr.mxu0 0.0
          %705 = vmatpush1.msra.mxu0 0.0
          %706 = vmatprep.subr.mxu0 0.0
          %707 = vmatpush1.msra.mxu0 0.0
          %708 = vmatprep.subr.mxu0 0.0
          %709 = vmatpush1.msra.mxu0 0.0
          %710 = vmatprep.subr.mxu0 0.0
          %711 = vmatpush1.msra.mxu0 0.0
          %712 = vmatprep.subr.mxu0 0.0
          %713 = vmatpush1.msra.mxu0 0.0
          %714 = vmatprep.subr.mxu0 0.0
          %715 = vmatpush1.msra.mxu0 0.0
          %716 = vmatprep.mubr.f32.mxu0 0.0
          %717 = vmatmul.mubr.f32.gmra.mrb[0].mxu0 %v443
          %v718 = vpop.f32.mrb[0].mxu0
          %v719 = vadd.f32 %v424, %v718
          %v720 = vpop.f32.mrb[0].mxu0
          %721 = vdwg.mxu0
          %vm722 = vcmp.gt.f32.partialorder %v719, 0.0
          %v723 = vmul.f32 %v719, 0.1
          %v724 = vsel %vm722, %v719, %v723
          %v726 = vsel %vm543, %v724, 0
          %728 = vmatprep.subr.mxu0 0.0
          %729 = vmatpush1.msra.mxu0 %v726
          %730 = vmatprep.subr.mxu0 0.0
          %731 = vmatpush1.msra.mxu0 0.0
          %732 = vmatprep.subr.mxu0 0.0
          %733 = vmatpush1.msra.mxu0 0.0
          %734 = vmatprep.subr.mxu0 0.0
          %735 = vmatpush1.msra.mxu0 0.0
          %736 = vmatprep.subr.mxu0 0.0
          %737 = vmatpush1.msra.mxu0 0.0
          %738 = vmatprep.subr.mxu0 0.0
          %739 = vmatpush1.msra.mxu0 0.0
          %740 = vmatprep.subr.mxu0 0.0
          %741 = vmatpush1.msra.mxu0 0.0
          %742 = vmatprep.subr.mxu0 0.0
          %743 = vmatpush1.msra.mxu0 0.0
          %744 = vmatprep.subr.mxu0 0.0
          %745 = vmatpush1.msra.mxu0 0.0
          %746 = vmatprep.subr.mxu0 0.0
          %747 = vmatpush1.msra.mxu0 0.0
          %748 = vmatprep.subr.mxu0 0.0
          %749 = vmatpush1.msra.mxu0 0.0
          %750 = vmatprep.subr.mxu0 0.0
          %751 = vmatpush1.msra.mxu0 0.0
          %752 = vmatprep.subr.mxu0 0.0
          %753 = vmatpush1.msra.mxu0 0.0
          %754 = vmatprep.subr.mxu0 0.0
          %755 = vmatpush1.msra.mxu0 0.0
          %756 = vmatprep.subr.mxu0 0.0
          %757 = vmatpush1.msra.mxu0 0.0
          %758 = vmatprep.subr.mxu0 0.0
          %759 = vmatpush1.msra.mxu0 0.0
          %760 = vmatprep.subr.mxu0 0.0
          %761 = vmatpush1.msra.mxu0 0.0
          %762 = vmatprep.subr.mxu0 0.0
          %763 = vmatpush1.msra.mxu0 0.0
          %764 = vmatprep.subr.mxu0 0.0
          %765 = vmatpush1.msra.mxu0 0.0
          %766 = vmatprep.subr.mxu0 0.0
          %767 = vmatpush1.msra.mxu0 0.0
          %768 = vmatprep.subr.mxu0 0.0
          %769 = vmatpush1.msra.mxu0 0.0
          %770 = vmatprep.subr.mxu0 0.0
          %771 = vmatpush1.msra.mxu0 0.0
          %772 = vmatprep.subr.mxu0 0.0
          %773 = vmatpush1.msra.mxu0 0.0
          %774 = vmatprep.subr.mxu0 0.0
          %775 = vmatpush1.msra.mxu0 0.0
          %776 = vmatprep.subr.mxu0 0.0
          %777 = vmatpush1.msra.mxu0 0.0
          %778 = vmatprep.subr.mxu0 0.0
          %779 = vmatpush1.msra.mxu0 0.0
          %780 = vmatprep.subr.mxu0 0.0
          %781 = vmatpush1.msra.mxu0 0.0
          %782 = vmatprep.subr.mxu0 0.0
          %783 = vmatpush1.msra.mxu0 0.0
          %784 = vmatprep.subr.mxu0 0.0
          %785 = vmatpush1.msra.mxu0 0.0
          %786 = vmatprep.subr.mxu0 0.0
          %787 = vmatpush1.msra.mxu0 0.0
          %788 = vmatprep.subr.mxu0 0.0
          %789 = vmatpush1.msra.mxu0 0.0
          %790 = vmatprep.subr.mxu0 0.0
          %791 = vmatpush1.msra.mxu0 0.0
          %792 = vmatprep.mubr.f32.mxu0 0.0
          %793 = vmatmul.mubr.f32.gmra.mrb[0].mxu0 %v520
          %v794 = vpop.f32.mrb[0].mxu0
          %v795 = vadd.f32 %v433, %v794
          %v796 = vpop.f32.mrb[0].mxu0
          %797 = vmatprep.mubr.f32.mxu0 0.0
          %798 = vmatmul.mubr.f32.gmra.mrb[0].mxu0 %v523
          %v799 = vpop.f32.mrb[0].mxu0
          %v800 = vadd.f32 %v434, %v799
          %v801 = vpop.f32.mrb[0].mxu0
          %802 = vmatprep.mubr.f32.mxu0 0.0
          %803 = vmatmul.mubr.f32.gmra.mrb[0].mxu0 %v526
          %v804 = vpop.f32.mrb[0].mxu0
          %v805 = vadd.f32 %v435, %v804
          %v806 = vpop.f32.mrb[0].mxu0
          %807 = vmatprep.mubr.f32.mxu0 0.0
          %808 = vmatmul.mubr.f32.gmra.mrb[0].mxu0 %v529
          %v809 = vpop.f32.mrb[0].mxu0
          %v810 = vadd.f32 %v436, %v809
          %v811 = vpop.f32.mrb[0].mxu0
          %812 = vmatprep.mubr.f32.mxu0 0.0
          %813 = vmatmul.mubr.f32.gmra.mrb[0].mxu0 %v532
          %v814 = vpop.f32.mrb[0].mxu0
          %v815 = vadd.f32 %v437, %v814
          %v816 = vpop.f32.mrb[0].mxu0
          %817 = vmatprep.mubr.f32.mxu0 0.0
          %818 = vmatmul.mubr.f32.gmra.mrb[0].mxu0 %v535
          %v819 = vpop.f32.mrb[0].mxu0
          %v820 = vadd.f32 %v438, %v819
          %v821 = vpop.f32.mrb[0].mxu0
          %822 = vmatprep.mubr.f32.mxu0 0.0
          %823 = vmatmul.mubr.f32.gmra.mrb[0].mxu0 %v538
          %v824 = vpop.f32.mrb[0].mxu0
          %v825 = vadd.f32 %v439, %v824
          %v826 = vpop.f32.mrb[0].mxu0
          %827 = vmatprep.mubr.f32.mxu0 0.0
          %828 = vmatmul.mubr.f32.gmra.mrb[0].mxu0 %v541
          %v829 = vpop.f32.mrb[0].mxu0
          %v830 = vadd.f32 %v440, %v829
          %v831 = vpop.f32.mrb[0].mxu0
          %832 = vdwg.mxu0
          %v833 = vadd.f32 %v614, %v795
          %v834 = vadd.f32 %v619, %v800
          %v835 = vadd.f32 %v624, %v805
          %v836 = vadd.f32 %v629, %v810
          %v837 = vadd.f32 %v634, %v815
          %v838 = vadd.f32 %v639, %v820
          %v839 = vadd.f32 %v644, %v825
          %v840 = vadd.f32 %v649, %v830
          %v841 = vxor.u32 %v833, 2147483648
          %v842 = vxor.u32 %v834, 2147483648
          %v843 = vxor.u32 %v835, 2147483648
          %v844 = vxor.u32 %v836, 2147483648
          %v845 = vxor.u32 %v837, 2147483648
          %v846 = vxor.u32 %v838, 2147483648
          %v847 = vxor.u32 %v839, 2147483648
          %v848 = vxor.u32 %v840, 2147483648
          %v849 = vmul.f32 %v841, 1.442695
          %v850 = vpow.pop %v849
          %v851 = vmul.f32 %v842, 1.442695
          %v852 = vpow.pop %v851
          %v853 = vmul.f32 %v843, 1.442695
          %v854 = vpow.pop %v853
          %v855 = vmul.f32 %v844, 1.442695
          %v856 = vpow.pop %v855
          %v857 = vmul.f32 %v845, 1.442695
          %v858 = vpow.pop %v857
          %v859 = vmul.f32 %v846, 1.442695
          %v860 = vpow.pop %v859
          %v861 = vmul.f32 %v847, 1.442695
          %v862 = vpow.pop %v861
          %v863 = vmul.f32 %v848, 1.442695
          %v864 = vpow.pop %v863
          %v865 = vadd.f32 %v850, 1.0
          %v866 = vadd.f32 %v852, 1.0
          %v867 = vadd.f32 %v854, 1.0
          %v868 = vadd.f32 %v856, 1.0
          %v869 = vadd.f32 %v858, 1.0
          %v870 = vadd.f32 %v860, 1.0
          %v871 = vadd.f32 %v862, 1.0
          %v872 = vadd.f32 %v864, 1.0
          %v873 = vrcp.pop %v865
          %v874 = vmul.f32 1.0, %v873
          %v875 = vrcp.pop %v866
          %v876 = vmul.f32 1.0, %v875
          %v877 = vrcp.pop %v867
          %v878 = vmul.f32 1.0, %v877
          %v879 = vrcp.pop %v868
          %v880 = vmul.f32 1.0, %v879
          %v881 = vrcp.pop %v869
          %v882 = vmul.f32 1.0, %v881
          %v883 = vrcp.pop %v870
          %v884 = vmul.f32 1.0, %v883
          %v885 = vrcp.pop %v871
          %v886 = vmul.f32 1.0, %v885
          %v887 = vrcp.pop %v872
          %v888 = vmul.f32 1.0, %v887
          %889 = vst.msk [vmem:[%s261] sm:$0xff] %vm339, %v874
          %890 = vst.msk [vmem:[%s261 + $0x8] sm:$0xff] %vm339, %v876
          %891 = vst.msk [vmem:[%s261 + $0x10] sm:$0xff] %vm339, %v878
          %892 = vst.msk [vmem:[%s261 + $0x18] sm:$0xff] %vm339, %v880
          %893 = vst.msk [vmem:[%s261 + $0x20] sm:$0xff] %vm339, %v882
          %894 = vst.msk [vmem:[%s261 + $0x28] sm:$0xff] %vm339, %v884
          %895 = vst.msk [vmem:[%s261 + $0x30] sm:$0xff] %vm339, %v886
          %896 = vst.msk [vmem:[%s261 + $0x38] sm:$0xff] %vm339, %v888
        $region52: #{tpu_custom_call.1} parent=39 // pred_fallthru
          _
        %p897 = scmp.lt.s32.totalorder %s23, 1
        %s898 = scalar_select %p897, %s23, 1
        %s899 = smul.addr %s898, 8
        %s900 = smul.addr %s899, 8
        %s901 = scalar_lea.vmem %s5, %s900
        // Predicated region
        $region53: #{tpu_custom_call.1} parent=39 // pred_check
          %p902 = pneg %p161
        $region54: #{tpu_custom_call.1} parent=39 // pred_check_branch
          %904 = sbr.rel (%p902) target = $region56
        $region55: #{tpu_custom_call.1} parent=39 // pred_region
          _
        $region56: #{tpu_custom_call.1} parent=39 // pred_fallthru
          _
      $region40: #{tpu_custom_call.1} parent=5 // pred_fallthru
        _
      %p905 = scmp.le.s32.totalorder 2, %s14
      // Predicated region
      $region57: #{tpu_custom_call.1} parent=5 // pred_check
        %p906 = pneg %p905
      $region58: #{tpu_custom_call.1} parent=5 // pred_check_branch
        %908 = sbr.rel (%p906) target = $region60
      $region59: #{tpu_custom_call.1} parent=5 // pred_region
        %s909 = ssub.s32 %s14, 2
        // Predicated region
        $region61: #{tpu_custom_call.1} parent=59 // pred_check
          %p910 = pneg %p167
        $region62: #{tpu_custom_call.1} parent=59 // pred_check_branch
          %912 = sbr.rel (%p910) target = $region64
        $region63: #{tpu_custom_call.1} parent=59 // pred_region
          %p913 = scmp.lt.s32.totalorder %s25, 1
          %s914 = scalar_select %p913, %s25, 1
          %s915 = smul.addr %s914, 8
          %s916 = smul.addr %s915, 8
          %s917 = scalar_lea.vmem %s5, %s916
        $region64: #{tpu_custom_call.1} parent=59 // pred_fallthru
          _
      $region60: #{tpu_custom_call.1} parent=5 // pred_fallthru
        _
    $region6: #{tpu_custom_call.1} parent=1 // loop_footer
      %s18 = sadd.s32 1, %s14
    $region7: #{tpu_custom_call.1} parent=1 // loop_footer_branch
      %13 = sbr.rel target = $region3
    $region8: #{tpu_custom_call.1} parent=1 // loop_exit
      _
    %918 = vsyncpa [#allocation5], 1
    %s919 = scalar_lea.sflag [#allocation5], 1
    %920 = vsyncpa %s919, 1

</llo_original>
